<compile_context>
chip_gen: v7x
topology: tpu7x:2x2x1
jax: 0.10.0
libtpu: 0.0.40
codegen_flags: <defaults>
</compile_context>

<pallas_src>
import functools

import jax
import jax.numpy as jnp
from jax.experimental import pallas as pl
from jax.experimental.pallas import tpu as pltpu


def _pad_upsample_matrix(n_in, scale, pad, dtype):
    """One-hot (n_in*scale + 2*pad, n_in) matrix fusing nearest-upsample + reflection pad."""
    n_up = n_in * scale
    p = jnp.arange(n_up + 2 * pad)
    u = jnp.abs(p - pad)                                   # reflect at the start
    u = jnp.where(u > n_up - 1, 2 * (n_up - 1) - u, u)     # reflect at the end
    src = u // scale                                       # nearest-neighbour source index
    return (src[:, None] == jnp.arange(n_in)[None, :]).astype(dtype)


def _fused_kernel(x_ref, ph_ref, wm_ref, b_ref, o_ref, *, KH):
    """Fused upsample + reflect-pad + conv, whole batch in one step.

    x_ref  : (N*Hin,  Cin*Win)            original images, channels folded onto lanes
    ph_ref : (KH, N*Hout, N*Hin)          block-diag one-hot row selectors (upsample+pad+stride in H)
    wm_ref : (KH, Cin*Win, Wout*Cout)     conv weights with W upsample/pad/Toeplitz pre-folded
    b_ref  : (1, Wout*Cout)               bias tiled over Wout
    o_ref  : (N*Hout, Wout*Cout)          lane-dense output
    """
    f32 = jnp.float32
    M, L = o_ref.shape
    # Bias folded into the accumulator init (saves a VPU pass over acc).
    acc = jnp.broadcast_to(b_ref[...].astype(f32), (M, L))
    for kh in range(KH):                                   # static unroll over kernel rows
        # Row selection (upsample + reflect pad + H-stride) as an exact one-hot matmul on
        # the MXU: no misaligned sublane slices, no strided gathers.
        xsel = jnp.dot(ph_ref[kh], x_ref[...], preferred_element_type=f32)
        acc = acc + jnp.dot(xsel, wm_ref[kh], preferred_element_type=f32)
    o_ref[...] = acc.astype(o_ref.dtype)


def upsample_conv_layer(x_nchw, weight, bias, *, kernel_size, stride, upsample=None):
    """Forward pass of UpsampleConvLayer.

    x_nchw : (N, Cin, H, W)
    weight : (Cout, Cin, KH, KW)   (PyTorch Conv2d layout)
    bias   : (Cout,)
    Returns (N, Cout, Hout, Wout) matching the PyTorch module.
    """
    N, Cin, Hin, Win = x_nchw.shape
    Cout = weight.shape[0]
    KH = KW = kernel_size
    pad = kernel_size // 2
    s = int(upsample) if upsample else 1

    Hup, Wup = Hin * s, Win * s
    Hp, Wp = Hup + 2 * pad, Wup + 2 * pad
    Hout = (Hp - KH) // stride + 1
    Wout = (Wp - KW) // stride + 1

    f32 = jnp.float32

    # ---------------- wrapper-side constant folding (all tiny; fused under jit) ----------
    # H selector: for kernel row kh, padded row index is kh + stride*ho.  Block-diagonal
    # over the batch so the whole batch lives on the matmul M axis.
    P_H = _pad_upsample_matrix(Hin, s, pad, f32)                       # (Hp, Hin)
    h_rows = jnp.arange(KH)[:, None] + stride * jnp.arange(Hout)[None, :]
    PH_sel = P_H[h_rows]                                               # (KH, Hout, Hin)
    PH_blk = jnp.einsum('nm,khi->knhmi', jnp.eye(N, dtype=f32), PH_sel)
    PH_blk = PH_blk.reshape(KH, N * Hout, N * Hin)                     # (KH, N*Hout, N*Hin)

    # W path: block-Toeplitz conv weights in the padded domain, then fold the
    # upsample+reflect-pad one-hot map into them so the kernel contracts K = Cin*Win.
    # TODO(synk): at production sizes build only the (Cin*KW)-wide band per Wout tile.
    P_W = _pad_upsample_matrix(Win, s, pad, f32).T                     # (Win, Wp)
    PW_blk = jnp.kron(jnp.eye(Cin, dtype=f32), P_W)                    # (Cin*Win, Cin*Wp)

    # wm[kh, ci*Wp + q, wo*Cout + co] = weight[co, ci, kh, q - wo*stride] (when in range).
    w_t = jnp.transpose(weight.astype(f32), (2, 1, 3, 0))              # (KH, Cin, KW, Cout)
    q_idx = jnp.arange(Wp)
    wo_idx = jnp.arange(Wout)
    kw_idx = q_idx[:, None] - wo_idx[None, :] * stride                 # (Wp, Wout)
    valid = (kw_idx >= 0) & (kw_idx < KW)
    kw_c = jnp.clip(kw_idx, 0, KW - 1)
    wm = w_t[:, :, kw_c, :] * valid[None, None, :, :, None].astype(f32)
    wm = wm.reshape(KH, Cin * Wp, Wout * Cout)                         # (KH, Cin*Wp, Wout*Cout)
    wm_fold = jnp.einsum('iq,kqo->kio', PW_blk, wm)                    # (KH, Cin*Win, Wout*Cout)

    b_row = jnp.tile(bias.astype(f32), Wout).reshape(1, Wout * Cout)

    # (N, Cin, H, W) -> (N*H, Cin*W): channels folded onto the lane axis of the kernel input.
    x_flat = jnp.transpose(x_nchw, (0, 2, 1, 3)).reshape(N * Hin, Cin * Win)

    kernel = functools.partial(_fused_kernel, KH=KH)

    out2 = pl.pallas_call(
        kernel,
        out_shape=jax.ShapeDtypeStruct((N * Hout, Wout * Cout), x_nchw.dtype),
        grid_spec=pltpu.PrefetchScalarGridSpec(
            num_scalar_prefetch=0,
            grid=(1,),
            in_specs=[
                pl.BlockSpec((N * Hin, Cin * Win), lambda i: (0, 0)),
                pl.BlockSpec((KH, N * Hout, N * Hin), lambda i: (0, 0, 0)),
                pl.BlockSpec((KH, Cin * Win, Wout * Cout), lambda i: (0, 0, 0)),
                pl.BlockSpec((1, Wout * Cout), lambda i: (0, 0)),
            ],
            out_specs=pl.BlockSpec((N * Hout, Wout * Cout), lambda i: (0, 0)),
        ),
        compiler_params=pltpu.CompilerParams(
            dimension_semantics=("arbitrary",)),
    )(x_flat, PH_blk, wm_fold, b_row)

    # (N*Hout, Wout*Cout) -> (N, Cout, Hout, Wout) to match PyTorch output convention.
    return jnp.transpose(out2.reshape(N, Hout, Wout, Cout), (0, 3, 1, 2))


def _reference(x_nchw, weight, bias, *, kernel_size, stride, upsample=None):
    """Pure-JAX reference (lax conv) for validation."""
    x = x_nchw
    if upsample:
        s = int(upsample)
        x = jnp.repeat(jnp.repeat(x, s, axis=2), s, axis=3)
    pad = kernel_size // 2
    x = jnp.pad(x, ((0, 0), (0, 0), (pad, pad), (pad, pad)), mode="reflect")
    out = jax.lax.conv_general_dilated(
        x.astype(jnp.float32), weight.astype(jnp.float32),
        window_strides=(stride, stride), padding="VALID",
        dimension_numbers=("NCHW", "OIHW", "NCHW"))
    return out + bias.reshape(1, -1, 1, 1)


def _check(x, weight, bias, *, kernel_size, stride, upsample):
    fwd = jax.jit(functools.partial(
        upsample_conv_layer, kernel_size=kernel_size, stride=stride,
        upsample=upsample))
    out = jax.block_until_ready(fwd(x, weight, bias))
    ref = _reference(x, weight, bias, kernel_size=kernel_size, stride=stride,
                     upsample=upsample)
    assert out.shape == ref.shape, (out.shape, ref.shape)
    err = float(jnp.max(jnp.abs(out - ref)))
    assert jnp.allclose(out, ref, atol=1e-4, rtol=1e-4), err
    return out


if __name__ == "__main__":
    # Module config: UpsampleConvLayer(in_channels=4, out_channels=4,
    #                                  kernel_size=3, stride=1, upsample=2)
    in_channels, out_channels = 4, 4
    kernel_size = 3

    key = jax.random.PRNGKey(0)
    kx, kw, kb = jax.random.split(key, 3)

    x = jax.random.normal(kx, (2, in_channels, 16, 16), dtype=jnp.float32)
    weight = 0.1 * jax.random.normal(
        kw, (out_channels, in_channels, kernel_size, kernel_size),
        dtype=jnp.float32)
    bias = 0.1 * jax.random.normal(kb, (out_channels,), dtype=jnp.float32)

    # Primary config: upsample=2, stride=1 (the typical UpsampleConvLayer use).
    _check(x, weight, bias, kernel_size=kernel_size, stride=1, upsample=2)
    # Also exercise the previously-untested paths: no upsample, stride=2.
    _check(x, weight, bias, kernel_size=kernel_size, stride=2, upsample=None)

    print("KERNEL_OK")
</pallas_src>

<mosaic_0001>
module attributes {stable_mosaic.version = 11 : i64} {
  func.func @_fused_kernel(%arg0: i32, %arg1: memref<32x64xf32, #tpu.memory_space<vmem>>, %arg2: memref<3x64x32xf32, #tpu.memory_space<vmem>>, %arg3: memref<3x64x128xf32, #tpu.memory_space<vmem>>, %arg4: memref<1x128xf32, #tpu.memory_space<vmem>>, %arg5: memref<64x128xf32, #tpu.memory_space<vmem>>) attributes {dimension_semantics = [#tpu.dimension_semantics<arbitrary>], iteration_bounds = array<i64: 1>, scalar_prefetch = 0 : i64, scratch_operands = 0 : i64, tpu.core_type = #tpu.core_type<tc>, window_params = [{pipeline_mode = #tpu.pipeline_mode<synchronous>, transform_indices = @transform_0, window_bounds = array<i64: 32, 64>}, {pipeline_mode = #tpu.pipeline_mode<synchronous>, transform_indices = @transform_1, window_bounds = array<i64: 3, 64, 32>}, {pipeline_mode = #tpu.pipeline_mode<synchronous>, transform_indices = @transform_2, window_bounds = array<i64: 3, 64, 128>}, {pipeline_mode = #tpu.pipeline_mode<synchronous>, transform_indices = @transform_3, window_bounds = array<i64: 1, 128>}, {pipeline_mode = #tpu.pipeline_mode<synchronous>, transform_indices = @transform_4, window_bounds = array<i64: 64, 128>}]} {
    %c0 = arith.constant 0 : index
    %c0_0 = arith.constant 0 : index
    %0 = vector.load %arg4[%c0, %c0_0] : memref<1x128xf32, #tpu.memory_space<vmem>>, vector<1x128xf32>
    %1 = vector.shape_cast %0 : vector<1x128xf32> to vector<1x128xf32>
    %2 = vector.broadcast %1 : vector<1x128xf32> to vector<64x128xf32>
    %c0_1 = arith.constant 0 : index
    %c0_2 = arith.constant 0 : index
    %c0_3 = arith.constant 0 : index
    %3 = vector.load %arg2[%c0_1, %c0_2, %c0_3] : memref<3x64x32xf32, #tpu.memory_space<vmem>>, vector<1x64x32xf32>
    %4 = vector.shape_cast %3 : vector<1x64x32xf32> to vector<64x32xf32>
    %c0_4 = arith.constant 0 : index
    %c0_5 = arith.constant 0 : index
    %5 = vector.load %arg1[%c0_4, %c0_5] : memref<32x64xf32, #tpu.memory_space<vmem>>, vector<32x64xf32>
    %cst = arith.constant dense<0.000000e+00> : vector<64x64xf32>
    %6 = tpu.matmul %4, %5, %cst {dimension_numbers = #tpu.dot_dimension_numbers<[1], [0], [0], [1], [0, 0, 1, 1], [], []>} : vector<64x32xf32>, vector<32x64xf32>, vector<64x64xf32> -> vector<64x64xf32>
    %c0_6 = arith.constant 0 : index
    %c0_7 = arith.constant 0 : index
    %c0_8 = arith.constant 0 : index
    %7 = vector.load %arg3[%c0_6, %c0_7, %c0_8] : memref<3x64x128xf32, #tpu.memory_space<vmem>>, vector<1x64x128xf32>
    %8 = vector.shape_cast %7 : vector<1x64x128xf32> to vector<64x128xf32>
    %cst_9 = arith.constant dense<0.000000e+00> : vector<64x128xf32>
    %9 = tpu.matmul %6, %8, %cst_9 {dimension_numbers = #tpu.dot_dimension_numbers<[1], [0], [0], [1], [0, 0, 1, 1], [], []>} : vector<64x64xf32>, vector<64x128xf32>, vector<64x128xf32> -> vector<64x128xf32>
    %10 = arith.addf %2, %9 : vector<64x128xf32>
    %c1 = arith.constant 1 : index
    %c0_10 = arith.constant 0 : index
    %c0_11 = arith.constant 0 : index
    %11 = vector.load %arg2[%c1, %c0_10, %c0_11] : memref<3x64x32xf32, #tpu.memory_space<vmem>>, vector<1x64x32xf32>
    %12 = vector.shape_cast %11 : vector<1x64x32xf32> to vector<64x32xf32>
    %c0_12 = arith.constant 0 : index
    %c0_13 = arith.constant 0 : index
    %13 = vector.load %arg1[%c0_12, %c0_13] : memref<32x64xf32, #tpu.memory_space<vmem>>, vector<32x64xf32>
    %cst_14 = arith.constant dense<0.000000e+00> : vector<64x64xf32>
    %14 = tpu.matmul %12, %13, %cst_14 {dimension_numbers = #tpu.dot_dimension_numbers<[1], [0], [0], [1], [0, 0, 1, 1], [], []>} : vector<64x32xf32>, vector<32x64xf32>, vector<64x64xf32> -> vector<64x64xf32>
    %c1_15 = arith.constant 1 : index
    %c0_16 = arith.constant 0 : index
    %c0_17 = arith.constant 0 : index
    %15 = vector.load %arg3[%c1_15, %c0_16, %c0_17] : memref<3x64x128xf32, #tpu.memory_space<vmem>>, vector<1x64x128xf32>
    %16 = vector.shape_cast %15 : vector<1x64x128xf32> to vector<64x128xf32>
    %cst_18 = arith.constant dense<0.000000e+00> : vector<64x128xf32>
    %17 = tpu.matmul %14, %16, %cst_18 {dimension_numbers = #tpu.dot_dimension_numbers<[1], [0], [0], [1], [0, 0, 1, 1], [], []>} : vector<64x64xf32>, vector<64x128xf32>, vector<64x128xf32> -> vector<64x128xf32>
    %18 = arith.addf %10, %17 : vector<64x128xf32>
    %c2 = arith.constant 2 : index
    %c0_19 = arith.constant 0 : index
    %c0_20 = arith.constant 0 : index
    %19 = vector.load %arg2[%c2, %c0_19, %c0_20] : memref<3x64x32xf32, #tpu.memory_space<vmem>>, vector<1x64x32xf32>
    %20 = vector.shape_cast %19 : vector<1x64x32xf32> to vector<64x32xf32>
    %c0_21 = arith.constant 0 : index
    %c0_22 = arith.constant 0 : index
    %21 = vector.load %arg1[%c0_21, %c0_22] : memref<32x64xf32, #tpu.memory_space<vmem>>, vector<32x64xf32>
    %cst_23 = arith.constant dense<0.000000e+00> : vector<64x64xf32>
    %22 = tpu.matmul %20, %21, %cst_23 {dimension_numbers = #tpu.dot_dimension_numbers<[1], [0], [0], [1], [0, 0, 1, 1], [], []>} : vector<64x32xf32>, vector<32x64xf32>, vector<64x64xf32> -> vector<64x64xf32>
    %c2_24 = arith.constant 2 : index
    %c0_25 = arith.constant 0 : index
    %c0_26 = arith.constant 0 : index
    %23 = vector.load %arg3[%c2_24, %c0_25, %c0_26] : memref<3x64x128xf32, #tpu.memory_space<vmem>>, vector<1x64x128xf32>
    %24 = vector.shape_cast %23 : vector<1x64x128xf32> to vector<64x128xf32>
    %cst_27 = arith.constant dense<0.000000e+00> : vector<64x128xf32>
    %25 = tpu.matmul %22, %24, %cst_27 {dimension_numbers = #tpu.dot_dimension_numbers<[1], [0], [0], [1], [0, 0, 1, 1], [], []>} : vector<64x64xf32>, vector<64x128xf32>, vector<64x128xf32> -> vector<64x128xf32>
    %26 = arith.addf %18, %25 : vector<64x128xf32>
    %c0_28 = arith.constant 0 : index
    %c0_29 = arith.constant 0 : index
    %27 = vector.load %arg5[%c0_28, %c0_29] : memref<64x128xf32, #tpu.memory_space<vmem>>, vector<64x128xf32>
    tpu.vector_store %arg5[%c0_28, %c0_29], %26 {strides = array<i32>} : memref<64x128xf32, #tpu.memory_space<vmem>>, vector<64x128xf32>,
    return
  }
  func.func @transform_0(%arg0: i32) -> (i32, i32) {
    %c0_i32 = arith.constant 0 : i32
    %c0_i32_0 = arith.constant 0 : i32
    %c0_i32_1 = arith.constant 0 : i32
    return %c0_i32, %c0_i32_0 : i32, i32
  }
  func.func @transform_1(%arg0: i32) -> (i32, i32, i32) {
    %c0_i32 = arith.constant 0 : i32
    %c0_i32_0 = arith.constant 0 : i32
    %c0_i32_1 = arith.constant 0 : i32
    %c0_i32_2 = arith.constant 0 : i32
    return %c0_i32, %c0_i32_0, %c0_i32_1 : i32, i32, i32
  }
  func.func @transform_2(%arg0: i32) -> (i32, i32, i32) {
    %c0_i32 = arith.constant 0 : i32
    %c0_i32_0 = arith.constant 0 : i32
    %c0_i32_1 = arith.constant 0 : i32
    %c0_i32_2 = arith.constant 0 : i32
    return %c0_i32, %c0_i32_0, %c0_i32_1 : i32, i32, i32
  }
  func.func @transform_3(%arg0: i32) -> (i32, i32) {
    %c0_i32 = arith.constant 0 : i32
    %c0_i32_0 = arith.constant 0 : i32
    %c0_i32_1 = arith.constant 0 : i32
    return %c0_i32, %c0_i32_0 : i32, i32
  }
  func.func @transform_4(%arg0: i32) -> (i32, i32) {
    %c0_i32 = arith.constant 0 : i32
    %c0_i32_0 = arith.constant 0 : i32
    %c0_i32_1 = arith.constant 0 : i32
    return %c0_i32, %c0_i32_0 : i32, i32
  }
}

</mosaic_0001>

<llo_original>
// kernel: tile.8
$region0: #{tile.8}
  #allocation0 [shape = 's32[1]{0}', space=sflag, size = 0x4, scoped, tag = 'scoped memory for tile.8']
  %s0 = inlined_call_operand.vmem [shape: f32[4], index: 0, kind: input, shape index: {}]
  %s1 = inlined_call_operand.vmem [shape: f32[32,4], index: 1, kind: output, shape index: {}]
  // Predicated region
  $region2: #{tile.8} parent=0 // pred_check
    _
  $region3: #{tile.8} parent=0 // pred_check_branch
    %3 = sbr.rel (0) target = $region5
  $region4: #{tile.8} parent=0 // pred_region
    _
  $region5: #{tile.8} parent=0 // pred_fallthru
    _
  %v4 = vld [vmem:[%s0] ss:$0 sm:$0xff]
  %5 = vst [vmem:[%s1] sm:$0xff] %v4
  %s6 = scalar_lea.vmem %s1, 8
  %7 = vst [vmem:[%s6] sm:$0xff] %v4
  %s8 = scalar_lea.vmem %s1, 16
  %9 = vst [vmem:[%s8] sm:$0xff] %v4
  %s10 = scalar_lea.vmem %s1, 24
  %11 = vst [vmem:[%s10] sm:$0xff] %v4

// kernel: tile.9
$region0: #{tile.9}
  %s0 = inlined_call_operand.vmem [shape: f32[32,4], index: 0, kind: input, shape index: {}]
  %s1 = inlined_call_operand.vmem [shape: f32[1,128], index: 1, kind: output, shape index: {}]
  $region1: #{tile.9} parent=0
    #allocation0 [shape = 'u8[4096]{0}', space=vmem, size = 0x1000, scoped, tag = 'scoped mem for output reshape']
    %v2 = vld [vmem:[%s0] sm:$0x1]
    %vm3 = vcmask 31744
    %4 = vst.msk [vmem:[#allocation0] sm:$0x1] %vm3, %v2
    %s5 = scalar_lea.vmem %s0, 31
    %v6 = vld [vmem:[%s5] sm:$0x1]
    %7 = vrot.lane.b32.xlu0 %v6, 124
    %v8 = vpop.permute.xlu0 %7
    %vm9 = vcmask 1048544
    %10 = vst.msk [vmem:[#allocation0] sm:$0x1] %vm9, %v8
    %s11 = scalar_lea.vmem %s0, 30
    %v12 = vld [vmem:[%s11] sm:$0x1]
    %13 = vrot.lane.b32.xlu0 %v12, 120
    %v14 = vpop.permute.xlu0 %13
    %vm15 = vcmask 1015744
    %16 = vst.msk [vmem:[#allocation0] sm:$0x1] %vm15, %v14
    %s17 = scalar_lea.vmem %s0, 29
    %v18 = vld [vmem:[%s17] sm:$0x1]
    %19 = vrot.lane.b32.xlu0 %v18, 116
    %v20 = vpop.permute.xlu0 %19
    %vm21 = vcmask 982944
    %22 = vst.msk [vmem:[#allocation0] sm:$0x1] %vm21, %v20
    %s23 = scalar_lea.vmem %s0, 28
    %v24 = vld [vmem:[%s23] sm:$0x1]
    %25 = vrot.lane.b32.xlu0 %v24, 112
    %v26 = vpop.permute.xlu0 %25
    %vm27 = vcmask 950144
    %28 = vst.msk [vmem:[#allocation0] sm:$0x1] %vm27, %v26
    %s29 = scalar_lea.vmem %s0, 27
    %v30 = vld [vmem:[%s29] sm:$0x1]
    %31 = vrot.lane.b32.xlu0 %v30, 108
    %v32 = vpop.permute.xlu0 %31
    %vm33 = vcmask 917344
    %34 = vst.msk [vmem:[#allocation0] sm:$0x1] %vm33, %v32
    %s35 = scalar_lea.vmem %s0, 26
    %v36 = vld [vmem:[%s35] sm:$0x1]
    %37 = vrot.lane.b32.xlu0 %v36, 104
    %v38 = vpop.permute.xlu0 %37
    %vm39 = vcmask 884544
    %40 = vst.msk [vmem:[#allocation0] sm:$0x1] %vm39, %v38
    %s41 = scalar_lea.vmem %s0, 25
    %v42 = vld [vmem:[%s41] sm:$0x1]
    %43 = vrot.lane.b32.xlu0 %v42, 100
    %v44 = vpop.permute.xlu0 %43
    %vm45 = vcmask 851744
    %46 = vst.msk [vmem:[#allocation0] sm:$0x1] %vm45, %v44
    %s47 = scalar_lea.vmem %s0, 24
    %v48 = vld [vmem:[%s47] sm:$0x1]
    %49 = vrot.lane.b32.xlu0 %v48, 96
    %v50 = vpop.permute.xlu0 %49
    %vm51 = vcmask 818944
    %52 = vst.msk [vmem:[#allocation0] sm:$0x1] %vm51, %v50
    %s53 = scalar_lea.vmem %s0, 23
    %v54 = vld [vmem:[%s53] sm:$0x1]
    %55 = vrot.lane.b32.xlu0 %v54, 92
    %v56 = vpop.permute.xlu0 %55
    %vm57 = vcmask 786144
    %58 = vst.msk [vmem:[#allocation0] sm:$0x1] %vm57, %v56
    %s59 = scalar_lea.vmem %s0, 22
    %v60 = vld [vmem:[%s59] sm:$0x1]
    %61 = vrot.lane.b32.xlu0 %v60, 88
    %v62 = vpop.permute.xlu0 %61
    %vm63 = vcmask 753344
    %64 = vst.msk [vmem:[#allocation0] sm:$0x1] %vm63, %v62
    %s65 = scalar_lea.vmem %s0, 21
    %v66 = vld [vmem:[%s65] sm:$0x1]
    %67 = vrot.lane.b32.xlu0 %v66, 84
    %v68 = vpop.permute.xlu0 %67
    %vm69 = vcmask 720544
    %70 = vst.msk [vmem:[#allocation0] sm:$0x1] %vm69, %v68
    %s71 = scalar_lea.vmem %s0, 20
    %v72 = vld [vmem:[%s71] sm:$0x1]
    %73 = vrot.lane.b32.xlu0 %v72, 80
    %v74 = vpop.permute.xlu0 %73
    %vm75 = vcmask 687744
    %76 = vst.msk [vmem:[#allocation0] sm:$0x1] %vm75, %v74
    %s77 = scalar_lea.vmem %s0, 19
    %v78 = vld [vmem:[%s77] sm:$0x1]
    %79 = vrot.lane.b32.xlu0 %v78, 76
    %v80 = vpop.permute.xlu0 %79
    %vm81 = vcmask 654944
    %82 = vst.msk [vmem:[#allocation0] sm:$0x1] %vm81, %v80
    %s83 = scalar_lea.vmem %s0, 18
    %v84 = vld [vmem:[%s83] sm:$0x1]
    %85 = vrot.lane.b32.xlu0 %v84, 72
    %v86 = vpop.permute.xlu0 %85
    %vm87 = vcmask 622144
    %88 = vst.msk [vmem:[#allocation0] sm:$0x1] %vm87, %v86
    %s89 = scalar_lea.vmem %s0, 17
    %v90 = vld [vmem:[%s89] sm:$0x1]
    %91 = vrot.lane.b32.xlu0 %v90, 68
    %v92 = vpop.permute.xlu0 %91
    %vm93 = vcmask 589344
    %94 = vst.msk [vmem:[#allocation0] sm:$0x1] %vm93, %v92
    %s95 = scalar_lea.vmem %s0, 16
    %v96 = vld [vmem:[%s95] sm:$0x1]
    %97 = vrot.lane.b32.xlu0 %v96, 64
    %v98 = vpop.permute.xlu0 %97
    %vm99 = vcmask 556544
    %100 = vst.msk [vmem:[#allocation0] sm:$0x1] %vm99, %v98
    %s101 = scalar_lea.vmem %s0, 15
    %v102 = vld [vmem:[%s101] sm:$0x1]
    %103 = vrot.lane.b32.xlu0 %v102, 60
    %v104 = vpop.permute.xlu0 %103
    %vm105 = vcmask 523744
    %106 = vst.msk [vmem:[#allocation0] sm:$0x1] %vm105, %v104
    %s107 = scalar_lea.vmem %s0, 14
    %v108 = vld [vmem:[%s107] sm:$0x1]
    %109 = vrot.lane.b32.xlu0 %v108, 56
    %v110 = vpop.permute.xlu0 %109
    %vm111 = vcmask 490944
    %112 = vst.msk [vmem:[#allocation0] sm:$0x1] %vm111, %v110
    %s113 = scalar_lea.vmem %s0, 13
    %v114 = vld [vmem:[%s113] sm:$0x1]
    %115 = vrot.lane.b32.xlu0 %v114, 52
    %v116 = vpop.permute.xlu0 %115
    %vm117 = vcmask 458144
    %118 = vst.msk [vmem:[#allocation0] sm:$0x1] %vm117, %v116
    %s119 = scalar_lea.vmem %s0, 12
    %v120 = vld [vmem:[%s119] sm:$0x1]
    %121 = vrot.lane.b32.xlu0 %v120, 48
    %v122 = vpop.permute.xlu0 %121
    %vm123 = vcmask 425344
    %124 = vst.msk [vmem:[#allocation0] sm:$0x1] %vm123, %v122
    %s125 = scalar_lea.vmem %s0, 11
    %v126 = vld [vmem:[%s125] sm:$0x1]
    %127 = vrot.lane.b32.xlu0 %v126, 44
    %v128 = vpop.permute.xlu0 %127
    %vm129 = vcmask 392544
    %130 = vst.msk [vmem:[#allocation0] sm:$0x1] %vm129, %v128
    %s131 = scalar_lea.vmem %s0, 10
    %v132 = vld [vmem:[%s131] sm:$0x1]
    %133 = vrot.lane.b32.xlu0 %v132, 40
    %v134 = vpop.permute.xlu0 %133
    %vm135 = vcmask 359744
    %136 = vst.msk [vmem:[#allocation0] sm:$0x1] %vm135, %v134
    %s137 = scalar_lea.vmem %s0, 9
    %v138 = vld [vmem:[%s137] sm:$0x1]
    %139 = vrot.lane.b32.xlu0 %v138, 36
    %v140 = vpop.permute.xlu0 %139
    %vm141 = vcmask 326944
    %142 = vst.msk [vmem:[#allocation0] sm:$0x1] %vm141, %v140
    %s143 = scalar_lea.vmem %s0, 8
    %v144 = vld [vmem:[%s143] sm:$0x1]
    %145 = vrot.lane.b32.xlu0 %v144, 32
    %v146 = vpop.permute.xlu0 %145
    %vm147 = vcmask 294144
    %148 = vst.msk [vmem:[#allocation0] sm:$0x1] %vm147, %v146
    %s149 = scalar_lea.vmem %s0, 7
    %v150 = vld [vmem:[%s149] sm:$0x1]
    %151 = vrot.lane.b32.xlu0 %v150, 28
    %v152 = vpop.permute.xlu0 %151
    %vm153 = vcmask 261344
    %154 = vst.msk [vmem:[#allocation0] sm:$0x1] %vm153, %v152
    %s155 = scalar_lea.vmem %s0, 6
    %v156 = vld [vmem:[%s155] sm:$0x1]
    %157 = vrot.lane.b32.xlu0 %v156, 24
    %v158 = vpop.permute.xlu0 %157
    %vm159 = vcmask 228544
    %160 = vst.msk [vmem:[#allocation0] sm:$0x1] %vm159, %v158
    %s161 = scalar_lea.vmem %s0, 5
    %v162 = vld [vmem:[%s161] sm:$0x1]
    %163 = vrot.lane.b32.xlu0 %v162, 20
    %v164 = vpop.permute.xlu0 %163
    %vm165 = vcmask 195744
    %166 = vst.msk [vmem:[#allocation0] sm:$0x1] %vm165, %v164
    %s167 = scalar_lea.vmem %s0, 4
    %v168 = vld [vmem:[%s167] sm:$0x1]
    %169 = vrot.lane.b32.xlu0 %v168, 16
    %v170 = vpop.permute.xlu0 %169
    %vm171 = vcmask 162944
    %172 = vst.msk [vmem:[#allocation0] sm:$0x1] %vm171, %v170
    %s173 = scalar_lea.vmem %s0, 3
    %v174 = vld [vmem:[%s173] sm:$0x1]
    %175 = vrot.lane.b32.xlu0 %v174, 12
    %v176 = vpop.permute.xlu0 %175
    %vm177 = vcmask 130144
    %178 = vst.msk [vmem:[#allocation0] sm:$0x1] %vm177, %v176
    %s179 = scalar_lea.vmem %s0, 2
    %v180 = vld [vmem:[%s179] sm:$0x1]
    %181 = vrot.lane.b32.xlu0 %v180, 8
    %v182 = vpop.permute.xlu0 %181
    %vm183 = vcmask 97344
    %184 = vst.msk [vmem:[#allocation0] sm:$0x1] %vm183, %v182
    %s185 = scalar_lea.vmem %s0, 1
    %v186 = vld [vmem:[%s185] sm:$0x1]
    %187 = vrot.lane.b32.xlu0 %v186, 4
    %v188 = vpop.permute.xlu0 %187
    %vm189 = vcmask 64544
    %190 = vst.msk [vmem:[#allocation0] sm:$0x1] %vm189, %v188
    %s192 = sshllo.u32 0, 1
    %v194 = vld [vmem:[#allocation0] sm:%s192]
    %s195 = sshllo.u32 0, 1
    %196 = vst [vmem:[%s1] sm:%s195] %v194

// kernel: upsample_conv_layer.1
$region0: #{upsample_conv_layer.1}
  #allocation0 [shape = 'u32[]', space=smem, size = 0x4, offset = 0x4, fixed_abs, tag = 'smem constant byte address 0x4 - core index']
  #allocation1 [shape = 'u32[144,128]{1,0:T(1,128)}', space=vmem, size = 0x12000, scoped, tag = 'internal scratch']
  %s0 = inlined_call_operand.vmem [shape: f32[32,64], index: 0, kind: input, shape index: {}]
  %s1 = inlined_call_operand.vmem [shape: f32[3,64,32], index: 1, kind: input, shape index: {}]
  %s2 = inlined_call_operand.vmem [shape: f32[3,64,128], index: 2, kind: input, shape index: {}]
  %s3 = inlined_call_operand.vmem [shape: f32[1,128], index: 3, kind: input, shape index: {}]
  %s4 = inlined_call_operand.vmem [shape: f32[64,128], index: 4, kind: output, shape index: {}]
  %s5 = sld [smem:[#allocation0]]
  $region26: #{upsample_conv_layer.1} parent=0
    _
  %s7 = ssub.s32 1, %s5
  %s8 = scalar_select 0, %s7, %s5
  // Predicated region
  $region2: #{upsample_conv_layer.1} parent=0 // pred_check
    _
  $region3: #{upsample_conv_layer.1} parent=0 // pred_check_branch
    %10 = sbr.rel (0) target = $region5
  $region4: #{upsample_conv_layer.1} parent=0 // pred_region
    _
  $region5: #{upsample_conv_layer.1} parent=0 // pred_fallthru
    _
  // Predicated region
  $region6: #{upsample_conv_layer.1} parent=0 // pred_check
    _
  $region7: #{upsample_conv_layer.1} parent=0 // pred_check_branch
    %12 = sbr.rel (0) target = $region9
  $region8: #{upsample_conv_layer.1} parent=0 // pred_region
    _
  $region9: #{upsample_conv_layer.1} parent=0 // pred_fallthru
    _
  // Predicated region
  $region10: #{upsample_conv_layer.1} parent=0 // pred_check
    _
  $region11: #{upsample_conv_layer.1} parent=0 // pred_check_branch
    %14 = sbr.rel (0) target = $region13
  $region12: #{upsample_conv_layer.1} parent=0 // pred_region
    _
  $region13: #{upsample_conv_layer.1} parent=0 // pred_fallthru
    _
  // Predicated region
  $region14: #{upsample_conv_layer.1} parent=0 // pred_check
    _
  $region15: #{upsample_conv_layer.1} parent=0 // pred_check_branch
    %16 = sbr.rel (0) target = $region17
  $region16: #{upsample_conv_layer.1} parent=0 // pred_region
    _
  $region17: #{upsample_conv_layer.1} parent=0 // pred_fallthru
    _
  %v17 = vld [vmem:[%s3] sm:$0x1]
  %v19 = vlaneseq
  %v20 = vshrl.u32 %v19, 7
  %v21 = vsub.s32 0, %v20
  %v22 = vrot.slane %v17, %v21
  %v24 = vld [vmem:[%s1] sm:$0xff]
  %v25 = vld [vmem:[%s1 + $0x8] sm:$0xff]
  %v26 = vld [vmem:[%s1 + $0x10] sm:$0xff]
  %v27 = vld [vmem:[%s1 + $0x18] sm:$0xff]
  %v28 = vld [vmem:[%s1 + $0x20] sm:$0xff]
  %v29 = vld [vmem:[%s1 + $0x28] sm:$0xff]
  %v30 = vld [vmem:[%s1 + $0x30] sm:$0xff]
  %v31 = vld [vmem:[%s1 + $0x38] sm:$0xff]
  %v32 = vld [vmem:[%s0] sm:$0xff]
  %v33 = vld [vmem:[%s0 + $0x8] sm:$0xff]
  %v34 = vld [vmem:[%s0 + $0x10] sm:$0xff]
  %v35 = vld [vmem:[%s0 + $0x18] sm:$0xff]
  %vm36 = vcmask 261120
  %v38 = vsel %vm36, %v24, 0
  %v41 = vsel %vm36, %v25, 0
  %v44 = vsel %vm36, %v26, 0
  %v47 = vsel %vm36, %v27, 0
  %v50 = vsel %vm36, %v28, 0
  %v53 = vsel %vm36, %v29, 0
  %v56 = vsel %vm36, %v30, 0
  %v59 = vsel %vm36, %v31, 0
  %61 = vmatprep.subr.mxu0 0.0
  %62 = vmatpush1.msra.mxu0 %v32
  %63 = vmatprep.subr.mxu0 0.0
  %64 = vmatpush1.msra.mxu0 %v33
  %65 = vmatprep.subr.mxu0 0.0
  %66 = vmatpush1.msra.mxu0 %v34
  %67 = vmatprep.subr.mxu0 0.0
  %68 = vmatpush1.msra.mxu0 %v35
  %69 = vmatprep.subr.mxu0 0.0
  %70 = vmatpush1.msra.mxu0 0.0
  %71 = vmatprep.subr.mxu0 0.0
  %72 = vmatpush1.msra.mxu0 0.0
  %73 = vmatprep.subr.mxu0 0.0
  %74 = vmatpush1.msra.mxu0 0.0
  %75 = vmatprep.subr.mxu0 0.0
  %76 = vmatpush1.msra.mxu0 0.0
  %77 = vmatprep.subr.mxu0 0.0
  %78 = vmatpush1.msra.mxu0 0.0
  %79 = vmatprep.subr.mxu0 0.0
  %80 = vmatpush1.msra.mxu0 0.0
  %81 = vmatprep.subr.mxu0 0.0
  %82 = vmatpush1.msra.mxu0 0.0
  %83 = vmatprep.subr.mxu0 0.0
  %84 = vmatpush1.msra.mxu0 0.0
  %85 = vmatprep.subr.mxu0 0.0
  %86 = vmatpush1.msra.mxu0 0.0
  %87 = vmatprep.subr.mxu0 0.0
  %88 = vmatpush1.msra.mxu0 0.0
  %89 = vmatprep.subr.mxu0 0.0
  %90 = vmatpush1.msra.mxu0 0.0
  %91 = vmatprep.subr.mxu0 0.0
  %92 = vmatpush1.msra.mxu0 0.0
  %93 = vmatprep.subr.mxu0 0.0
  %94 = vmatpush1.msra.mxu0 0.0
  %95 = vmatprep.subr.mxu0 0.0
  %96 = vmatpush1.msra.mxu0 0.0
  %97 = vmatprep.subr.mxu0 0.0
  %98 = vmatpush1.msra.mxu0 0.0
  %99 = vmatprep.subr.mxu0 0.0
  %100 = vmatpush1.msra.mxu0 0.0
  %101 = vmatprep.subr.mxu0 0.0
  %102 = vmatpush1.msra.mxu0 0.0
  %103 = vmatprep.subr.mxu0 0.0
  %104 = vmatpush1.msra.mxu0 0.0
  %105 = vmatprep.subr.mxu0 0.0
  %106 = vmatpush1.msra.mxu0 0.0
  %107 = vmatprep.subr.mxu0 0.0
  %108 = vmatpush1.msra.mxu0 0.0
  %109 = vmatprep.subr.mxu0 0.0
  %110 = vmatpush1.msra.mxu0 0.0
  %111 = vmatprep.subr.mxu0 0.0
  %112 = vmatpush1.msra.mxu0 0.0
  %113 = vmatprep.subr.mxu0 0.0
  %114 = vmatpush1.msra.mxu0 0.0
  %115 = vmatprep.subr.mxu0 0.0
  %116 = vmatpush1.msra.mxu0 0.0
  %117 = vmatprep.subr.mxu0 0.0
  %118 = vmatpush1.msra.mxu0 0.0
  %119 = vmatprep.subr.mxu0 0.0
  %120 = vmatpush1.msra.mxu0 0.0
  %121 = vmatprep.subr.mxu0 0.0
  %122 = vmatpush1.msra.mxu0 0.0
  %123 = vmatprep.subr.mxu0 0.0
  %124 = vmatpush1.msra.mxu0 0.0
  %125 = vmatprep.mubr.f32.mxu0 0.0
  %126 = vmatmul.mubr.f32.gmra.mrb[0].mxu0 %v38
  %v127 = vpop.f32.mrb[0].mxu0
  %v128 = vadd.f32 0.0, %v127
  %v129 = vpop.f32.mrb[0].mxu0
  %130 = vmatprep.mubr.f32.mxu0 0.0
  %131 = vmatmul.mubr.f32.gmra.mrb[0].mxu0 %v41
  %v132 = vpop.f32.mrb[0].mxu0
  %v133 = vadd.f32 0.0, %v132
  %v134 = vpop.f32.mrb[0].mxu0
  %135 = vmatprep.mubr.f32.mxu0 0.0
  %136 = vmatmul.mubr.f32.gmra.mrb[0].mxu0 %v44
  %v137 = vpop.f32.mrb[0].mxu0
  %v138 = vadd.f32 0.0, %v137
  %v139 = vpop.f32.mrb[0].mxu0
  %140 = vmatprep.mubr.f32.mxu0 0.0
  %141 = vmatmul.mubr.f32.gmra.mrb[0].mxu0 %v47
  %v142 = vpop.f32.mrb[0].mxu0
  %v143 = vadd.f32 0.0, %v142
  %v144 = vpop.f32.mrb[0].mxu0
  %145 = vmatprep.mubr.f32.mxu0 0.0
  %146 = vmatmul.mubr.f32.gmra.mrb[0].mxu0 %v50
  %v147 = vpop.f32.mrb[0].mxu0
  %v148 = vadd.f32 0.0, %v147
  %v149 = vpop.f32.mrb[0].mxu0
  %150 = vmatprep.mubr.f32.mxu0 0.0
  %151 = vmatmul.mubr.f32.gmra.mrb[0].mxu0 %v53
  %v152 = vpop.f32.mrb[0].mxu0
  %v153 = vadd.f32 0.0, %v152
  %v154 = vpop.f32.mrb[0].mxu0
  %155 = vmatprep.mubr.f32.mxu0 0.0
  %156 = vmatmul.mubr.f32.gmra.mrb[0].mxu0 %v56
  %v157 = vpop.f32.mrb[0].mxu0
  %v158 = vadd.f32 0.0, %v157
  %v159 = vpop.f32.mrb[0].mxu0
  %160 = vmatprep.mubr.f32.mxu0 0.0
  %161 = vmatmul.mubr.f32.gmra.mrb[0].mxu0 %v59
  %v162 = vpop.f32.mrb[0].mxu0
  %v163 = vadd.f32 0.0, %v162
  %v164 = vpop.f32.mrb[0].mxu0
  %165 = vdwg.mxu0
  %v166 = vld [vmem:[%s2] sm:$0xff]
  %v167 = vld [vmem:[%s2 + $0x8] sm:$0xff]
  %v168 = vld [vmem:[%s2 + $0x10] sm:$0xff]
  %v169 = vld [vmem:[%s2 + $0x18] sm:$0xff]
  %v170 = vld [vmem:[%s2 + $0x20] sm:$0xff]
  %v171 = vld [vmem:[%s2 + $0x28] sm:$0xff]
  %v172 = vld [vmem:[%s2 + $0x30] sm:$0xff]
  %v173 = vld [vmem:[%s2 + $0x38] sm:$0xff]
  %vm174 = vcmask 523264
  %v176 = vsel %vm174, %v128, 0
  %v179 = vsel %vm174, %v133, 0
  %v182 = vsel %vm174, %v138, 0
  %v185 = vsel %vm174, %v143, 0
  %v188 = vsel %vm174, %v148, 0
  %v191 = vsel %vm174, %v153, 0
  %v194 = vsel %vm174, %v158, 0
  %v197 = vsel %vm174, %v163, 0
  %199 = vmatprep.subr.mxu0 0.0
  %200 = vmatpush1.msra.mxu0 %v166
  %201 = vmatprep.subr.mxu0 0.0
  %202 = vmatpush1.msra.mxu0 %v167
  %203 = vmatprep.subr.mxu0 0.0
  %204 = vmatpush1.msra.mxu0 %v168
  %205 = vmatprep.subr.mxu0 0.0
  %206 = vmatpush1.msra.mxu0 %v169
  %207 = vmatprep.subr.mxu0 0.0
  %208 = vmatpush1.msra.mxu0 %v170
  %209 = vmatprep.subr.mxu0 0.0
  %210 = vmatpush1.msra.mxu0 %v171
  %211 = vmatprep.subr.mxu0 0.0
  %212 = vmatpush1.msra.mxu0 %v172
  %213 = vmatprep.subr.mxu0 0.0
  %214 = vmatpush1.msra.mxu0 %v173
  %215 = vmatprep.subr.mxu0 0.0
  %216 = vmatpush1.msra.mxu0 0.0
  %217 = vmatprep.subr.mxu0 0.0
  %218 = vmatpush1.msra.mxu0 0.0
  %219 = vmatprep.subr.mxu0 0.0
  %220 = vmatpush1.msra.mxu0 0.0
  %221 = vmatprep.subr.mxu0 0.0
  %222 = vmatpush1.msra.mxu0 0.0
  %223 = vmatprep.subr.mxu0 0.0
  %224 = vmatpush1.msra.mxu0 0.0
  %225 = vmatprep.subr.mxu0 0.0
  %226 = vmatpush1.msra.mxu0 0.0
  %227 = vmatprep.subr.mxu0 0.0
  %228 = vmatpush1.msra.mxu0 0.0
  %229 = vmatprep.subr.mxu0 0.0
  %230 = vmatpush1.msra.mxu0 0.0
  %231 = vmatprep.subr.mxu0 0.0
  %232 = vmatpush1.msra.mxu0 0.0
  %233 = vmatprep.subr.mxu0 0.0
  %234 = vmatpush1.msra.mxu0 0.0
  %235 = vmatprep.subr.mxu0 0.0
  %236 = vmatpush1.msra.mxu0 0.0
  %237 = vmatprep.subr.mxu0 0.0
  %238 = vmatpush1.msra.mxu0 0.0
  %239 = vmatprep.subr.mxu0 0.0
  %240 = vmatpush1.msra.mxu0 0.0
  %241 = vmatprep.subr.mxu0 0.0
  %242 = vmatpush1.msra.mxu0 0.0
  %243 = vmatprep.subr.mxu0 0.0
  %244 = vmatpush1.msra.mxu0 0.0
  %245 = vmatprep.subr.mxu0 0.0
  %246 = vmatpush1.msra.mxu0 0.0
  %247 = vmatprep.subr.mxu0 0.0
  %248 = vmatpush1.msra.mxu0 0.0
  %249 = vmatprep.subr.mxu0 0.0
  %250 = vmatpush1.msra.mxu0 0.0
  %251 = vmatprep.subr.mxu0 0.0
  %252 = vmatpush1.msra.mxu0 0.0
  %253 = vmatprep.subr.mxu0 0.0
  %254 = vmatpush1.msra.mxu0 0.0
  %255 = vmatprep.subr.mxu0 0.0
  %256 = vmatpush1.msra.mxu0 0.0
  %257 = vmatprep.subr.mxu0 0.0
  %258 = vmatpush1.msra.mxu0 0.0
  %259 = vmatprep.subr.mxu0 0.0
  %260 = vmatpush1.msra.mxu0 0.0
  %261 = vmatprep.subr.mxu0 0.0
  %262 = vmatpush1.msra.mxu0 0.0
  %263 = vmatprep.mubr.f32.mxu0 0.0
  %264 = vmatmul.mubr.f32.gmra.mrb[0].mxu0 %v176
  %v265 = vpop.f32.mrb[0].mxu0
  %v266 = vadd.f32 0.0, %v265
  %v267 = vpop.f32.mrb[0].mxu0
  %268 = vmatprep.mubr.f32.mxu0 0.0
  %269 = vmatmul.mubr.f32.gmra.mrb[0].mxu0 %v179
  %v270 = vpop.f32.mrb[0].mxu0
  %v271 = vadd.f32 0.0, %v270
  %v272 = vpop.f32.mrb[0].mxu0
  %273 = vmatprep.mubr.f32.mxu0 0.0
  %274 = vmatmul.mubr.f32.gmra.mrb[0].mxu0 %v182
  %v275 = vpop.f32.mrb[0].mxu0
  %v276 = vadd.f32 0.0, %v275
  %v277 = vpop.f32.mrb[0].mxu0
  %278 = vmatprep.mubr.f32.mxu0 0.0
  %279 = vmatmul.mubr.f32.gmra.mrb[0].mxu0 %v185
  %v280 = vpop.f32.mrb[0].mxu0
  %v281 = vadd.f32 0.0, %v280
  %v282 = vpop.f32.mrb[0].mxu0
  %283 = vmatprep.mubr.f32.mxu0 0.0
  %284 = vmatmul.mubr.f32.gmra.mrb[0].mxu0 %v188
  %v285 = vpop.f32.mrb[0].mxu0
  %v286 = vadd.f32 0.0, %v285
  %v287 = vpop.f32.mrb[0].mxu0
  %288 = vmatprep.mubr.f32.mxu0 0.0
  %289 = vmatmul.mubr.f32.gmra.mrb[0].mxu0 %v191
  %v290 = vpop.f32.mrb[0].mxu0
  %v291 = vadd.f32 0.0, %v290
  %v292 = vpop.f32.mrb[0].mxu0
  %293 = vmatprep.mubr.f32.mxu0 0.0
  %294 = vmatmul.mubr.f32.gmra.mrb[0].mxu0 %v194
  %v295 = vpop.f32.mrb[0].mxu0
  %v296 = vadd.f32 0.0, %v295
  %v297 = vpop.f32.mrb[0].mxu0
  %298 = vmatprep.mubr.f32.mxu0 0.0
  %299 = vmatmul.mubr.f32.gmra.mrb[0].mxu0 %v197
  %v300 = vpop.f32.mrb[0].mxu0
  %v301 = vadd.f32 0.0, %v300
  %v302 = vpop.f32.mrb[0].mxu0
  %303 = vdwg.mxu0
  %v304 = vadd.f32 %v22, %v266
  %v305 = vadd.f32 %v22, %v271
  %v306 = vadd.f32 %v22, %v276
  %v307 = vadd.f32 %v22, %v281
  %v308 = vadd.f32 %v22, %v286
  %v309 = vadd.f32 %v22, %v291
  %v310 = vadd.f32 %v22, %v296
  %v311 = vadd.f32 %v22, %v301
  %s312 = scalar_lea.vmem %s1, 64
  %v313 = vld [vmem:[%s312] sm:$0xff]
  %v314 = vld [vmem:[%s312 + $0x8] sm:$0xff]
  %v315 = vld [vmem:[%s312 + $0x10] sm:$0xff]
  %v316 = vld [vmem:[%s312 + $0x18] sm:$0xff]
  %v317 = vld [vmem:[%s312 + $0x20] sm:$0xff]
  %v318 = vld [vmem:[%s312 + $0x28] sm:$0xff]
  %v319 = vld [vmem:[%s312 + $0x30] sm:$0xff]
  %v320 = vld [vmem:[%s312 + $0x38] sm:$0xff]
  %v322 = vsel %vm36, %v313, 0
  %v325 = vsel %vm36, %v314, 0
  %v328 = vsel %vm36, %v315, 0
  %v331 = vsel %vm36, %v316, 0
  %v334 = vsel %vm36, %v317, 0
  %v337 = vsel %vm36, %v318, 0
  %v340 = vsel %vm36, %v319, 0
  %v343 = vsel %vm36, %v320, 0
  %345 = vmatprep.subr.mxu0 0.0
  %346 = vmatpush1.msra.mxu0 %v32
  %347 = vmatprep.subr.mxu0 0.0
  %348 = vmatpush1.msra.mxu0 %v33
  %349 = vmatprep.subr.mxu0 0.0
  %350 = vmatpush1.msra.mxu0 %v34
  %351 = vmatprep.subr.mxu0 0.0
  %352 = vmatpush1.msra.mxu0 %v35
  %353 = vmatprep.subr.mxu0 0.0
  %354 = vmatpush1.msra.mxu0 0.0
  %355 = vmatprep.subr.mxu0 0.0
  %356 = vmatpush1.msra.mxu0 0.0
  %357 = vmatprep.subr.mxu0 0.0
  %358 = vmatpush1.msra.mxu0 0.0
  %359 = vmatprep.subr.mxu0 0.0
  %360 = vmatpush1.msra.mxu0 0.0
  %361 = vmatprep.subr.mxu0 0.0
  %362 = vmatpush1.msra.mxu0 0.0
  %363 = vmatprep.subr.mxu0 0.0
  %364 = vmatpush1.msra.mxu0 0.0
  %365 = vmatprep.subr.mxu0 0.0
  %366 = vmatpush1.msra.mxu0 0.0
  %367 = vmatprep.subr.mxu0 0.0
  %368 = vmatpush1.msra.mxu0 0.0
  %369 = vmatprep.subr.mxu0 0.0
  %370 = vmatpush1.msra.mxu0 0.0
  %371 = vmatprep.subr.mxu0 0.0
  %372 = vmatpush1.msra.mxu0 0.0
  %373 = vmatprep.subr.mxu0 0.0
  %374 = vmatpush1.msra.mxu0 0.0
  %375 = vmatprep.subr.mxu0 0.0
  %376 = vmatpush1.msra.mxu0 0.0
  %377 = vmatprep.subr.mxu0 0.0
  %378 = vmatpush1.msra.mxu0 0.0
  %379 = vmatprep.subr.mxu0 0.0
  %380 = vmatpush1.msra.mxu0 0.0
  %381 = vmatprep.subr.mxu0 0.0
  %382 = vmatpush1.msra.mxu0 0.0
  %383 = vmatprep.subr.mxu0 0.0
  %384 = vmatpush1.msra.mxu0 0.0
  %385 = vmatprep.subr.mxu0 0.0
  %386 = vmatpush1.msra.mxu0 0.0
  %387 = vmatprep.subr.mxu0 0.0
  %388 = vmatpush1.msra.mxu0 0.0
  %389 = vmatprep.subr.mxu0 0.0
  %390 = vmatpush1.msra.mxu0 0.0
  %391 = vmatprep.subr.mxu0 0.0
  %392 = vmatpush1.msra.mxu0 0.0
  %393 = vmatprep.subr.mxu0 0.0
  %394 = vmatpush1.msra.mxu0 0.0
  %395 = vmatprep.subr.mxu0 0.0
  %396 = vmatpush1.msra.mxu0 0.0
  %397 = vmatprep.subr.mxu0 0.0
  %398 = vmatpush1.msra.mxu0 0.0
  %399 = vmatprep.subr.mxu0 0.0
  %400 = vmatpush1.msra.mxu0 0.0
  %401 = vmatprep.subr.mxu0 0.0
  %402 = vmatpush1.msra.mxu0 0.0
  %403 = vmatprep.subr.mxu0 0.0
  %404 = vmatpush1.msra.mxu0 0.0
  %405 = vmatprep.subr.mxu0 0.0
  %406 = vmatpush1.msra.mxu0 0.0
  %407 = vmatprep.subr.mxu0 0.0
  %408 = vmatpush1.msra.mxu0 0.0
  %409 = vmatprep.mubr.f32.mxu0 0.0
  %410 = vmatmul.mubr.f32.gmra.mrb[0].mxu0 %v322
  %v411 = vpop.f32.mrb[0].mxu0
  %v412 = vadd.f32 0.0, %v411
  %v413 = vpop.f32.mrb[0].mxu0
  %414 = vmatprep.mubr.f32.mxu0 0.0
  %415 = vmatmul.mubr.f32.gmra.mrb[0].mxu0 %v325
  %v416 = vpop.f32.mrb[0].mxu0
  %v417 = vadd.f32 0.0, %v416
  %v418 = vpop.f32.mrb[0].mxu0
  %419 = vmatprep.mubr.f32.mxu0 0.0
  %420 = vmatmul.mubr.f32.gmra.mrb[0].mxu0 %v328
  %v421 = vpop.f32.mrb[0].mxu0
  %v422 = vadd.f32 0.0, %v421
  %v423 = vpop.f32.mrb[0].mxu0
  %424 = vmatprep.mubr.f32.mxu0 0.0
  %425 = vmatmul.mubr.f32.gmra.mrb[0].mxu0 %v331
  %v426 = vpop.f32.mrb[0].mxu0
  %v427 = vadd.f32 0.0, %v426
  %v428 = vpop.f32.mrb[0].mxu0
  %429 = vmatprep.mubr.f32.mxu0 0.0
  %430 = vmatmul.mubr.f32.gmra.mrb[0].mxu0 %v334
  %v431 = vpop.f32.mrb[0].mxu0
  %v432 = vadd.f32 0.0, %v431
  %v433 = vpop.f32.mrb[0].mxu0
  %434 = vmatprep.mubr.f32.mxu0 0.0
  %435 = vmatmul.mubr.f32.gmra.mrb[0].mxu0 %v337
  %v436 = vpop.f32.mrb[0].mxu0
  %v437 = vadd.f32 0.0, %v436
  %v438 = vpop.f32.mrb[0].mxu0
  %439 = vmatprep.mubr.f32.mxu0 0.0
  %440 = vmatmul.mubr.f32.gmra.mrb[0].mxu0 %v340
  %v441 = vpop.f32.mrb[0].mxu0
  %v442 = vadd.f32 0.0, %v441
  %v443 = vpop.f32.mrb[0].mxu0
  %444 = vmatprep.mubr.f32.mxu0 0.0
  %445 = vmatmul.mubr.f32.gmra.mrb[0].mxu0 %v343
  %v446 = vpop.f32.mrb[0].mxu0
  %v447 = vadd.f32 0.0, %v446
  %v448 = vpop.f32.mrb[0].mxu0
  %449 = vdwg.mxu0
  %s450 = scalar_lea.vmem %s2, 64
  %v451 = vld [vmem:[%s450] sm:$0xff]
  %v452 = vld [vmem:[%s450 + $0x8] sm:$0xff]
  %v453 = vld [vmem:[%s450 + $0x10] sm:$0xff]
  %v454 = vld [vmem:[%s450 + $0x18] sm:$0xff]
  %v455 = vld [vmem:[%s450 + $0x20] sm:$0xff]
  %v456 = vld [vmem:[%s450 + $0x28] sm:$0xff]
  %v457 = vld [vmem:[%s450 + $0x30] sm:$0xff]
  %v458 = vld [vmem:[%s450 + $0x38] sm:$0xff]
  %v460 = vsel %vm174, %v412, 0
  %v463 = vsel %vm174, %v417, 0
  %v466 = vsel %vm174, %v422, 0
  %v469 = vsel %vm174, %v427, 0
  %v472 = vsel %vm174, %v432, 0
  %v475 = vsel %vm174, %v437, 0
  %v478 = vsel %vm174, %v442, 0
  %v481 = vsel %vm174, %v447, 0
  %483 = vmatprep.subr.mxu0 0.0
  %484 = vmatpush1.msra.mxu0 %v451
  %485 = vmatprep.subr.mxu0 0.0
  %486 = vmatpush1.msra.mxu0 %v452
  %487 = vmatprep.subr.mxu0 0.0
  %488 = vmatpush1.msra.mxu0 %v453
  %489 = vmatprep.subr.mxu0 0.0
  %490 = vmatpush1.msra.mxu0 %v454
  %491 = vmatprep.subr.mxu0 0.0
  %492 = vmatpush1.msra.mxu0 %v455
  %493 = vmatprep.subr.mxu0 0.0
  %494 = vmatpush1.msra.mxu0 %v456
  %495 = vmatprep.subr.mxu0 0.0
  %496 = vmatpush1.msra.mxu0 %v457
  %497 = vmatprep.subr.mxu0 0.0
  %498 = vmatpush1.msra.mxu0 %v458
  %499 = vmatprep.subr.mxu0 0.0
  %500 = vmatpush1.msra.mxu0 0.0
  %501 = vmatprep.subr.mxu0 0.0
  %502 = vmatpush1.msra.mxu0 0.0
  %503 = vmatprep.subr.mxu0 0.0
  %504 = vmatpush1.msra.mxu0 0.0
  %505 = vmatprep.subr.mxu0 0.0
  %506 = vmatpush1.msra.mxu0 0.0
  %507 = vmatprep.subr.mxu0 0.0
  %508 = vmatpush1.msra.mxu0 0.0
  %509 = vmatprep.subr.mxu0 0.0
  %510 = vmatpush1.msra.mxu0 0.0
  %511 = vmatprep.subr.mxu0 0.0
  %512 = vmatpush1.msra.mxu0 0.0
  %513 = vmatprep.subr.mxu0 0.0
  %514 = vmatpush1.msra.mxu0 0.0
  %515 = vmatprep.subr.mxu0 0.0
  %516 = vmatpush1.msra.mxu0 0.0
  %517 = vmatprep.subr.mxu0 0.0
  %518 = vmatpush1.msra.mxu0 0.0
  %519 = vmatprep.subr.mxu0 0.0
  %520 = vmatpush1.msra.mxu0 0.0
  %521 = vmatprep.subr.mxu0 0.0
  %522 = vmatpush1.msra.mxu0 0.0
  %523 = vmatprep.subr.mxu0 0.0
  %524 = vmatpush1.msra.mxu0 0.0
  %525 = vmatprep.subr.mxu0 0.0
  %526 = vmatpush1.msra.mxu0 0.0
  %527 = vmatprep.subr.mxu0 0.0
  %528 = vmatpush1.msra.mxu0 0.0
  %529 = vmatprep.subr.mxu0 0.0
  %530 = vmatpush1.msra.mxu0 0.0
  %531 = vmatprep.subr.mxu0 0.0
  %532 = vmatpush1.msra.mxu0 0.0
  %533 = vmatprep.subr.mxu0 0.0
  %534 = vmatpush1.msra.mxu0 0.0
  %535 = vmatprep.subr.mxu0 0.0
  %536 = vmatpush1.msra.mxu0 0.0
  %537 = vmatprep.subr.mxu0 0.0
  %538 = vmatpush1.msra.mxu0 0.0
  %539 = vmatprep.subr.mxu0 0.0
  %540 = vmatpush1.msra.mxu0 0.0
  %541 = vmatprep.subr.mxu0 0.0
  %542 = vmatpush1.msra.mxu0 0.0
  %543 = vmatprep.subr.mxu0 0.0
  %544 = vmatpush1.msra.mxu0 0.0
  %545 = vmatprep.subr.mxu0 0.0
  %546 = vmatpush1.msra.mxu0 0.0
  %547 = vmatprep.mubr.f32.mxu0 0.0
  %548 = vmatmul.mubr.f32.gmra.mrb[0].mxu0 %v460
  %v549 = vpop.f32.mrb[0].mxu0
  %v550 = vadd.f32 0.0, %v549
  %v551 = vpop.f32.mrb[0].mxu0
  %552 = vmatprep.mubr.f32.mxu0 0.0
  %553 = vmatmul.mubr.f32.gmra.mrb[0].mxu0 %v463
  %v554 = vpop.f32.mrb[0].mxu0
  %v555 = vadd.f32 0.0, %v554
  %v556 = vpop.f32.mrb[0].mxu0
  %557 = vmatprep.mubr.f32.mxu0 0.0
  %558 = vmatmul.mubr.f32.gmra.mrb[0].mxu0 %v466
  %v559 = vpop.f32.mrb[0].mxu0
  %v560 = vadd.f32 0.0, %v559
  %v561 = vpop.f32.mrb[0].mxu0
  %562 = vmatprep.mubr.f32.mxu0 0.0
  %563 = vmatmul.mubr.f32.gmra.mrb[0].mxu0 %v469
  %v564 = vpop.f32.mrb[0].mxu0
  %v565 = vadd.f32 0.0, %v564
  %v566 = vpop.f32.mrb[0].mxu0
  %567 = vmatprep.mubr.f32.mxu0 0.0
  %568 = vmatmul.mubr.f32.gmra.mrb[0].mxu0 %v472
  %v569 = vpop.f32.mrb[0].mxu0
  %v570 = vadd.f32 0.0, %v569
  %v571 = vpop.f32.mrb[0].mxu0
  %572 = vmatprep.mubr.f32.mxu0 0.0
  %573 = vmatmul.mubr.f32.gmra.mrb[0].mxu0 %v475
  %v574 = vpop.f32.mrb[0].mxu0
  %v575 = vadd.f32 0.0, %v574
  %v576 = vpop.f32.mrb[0].mxu0
  %577 = vmatprep.mubr.f32.mxu0 0.0
  %578 = vmatmul.mubr.f32.gmra.mrb[0].mxu0 %v478
  %v579 = vpop.f32.mrb[0].mxu0
  %v580 = vadd.f32 0.0, %v579
  %v581 = vpop.f32.mrb[0].mxu0
  %582 = vmatprep.mubr.f32.mxu0 0.0
  %583 = vmatmul.mubr.f32.gmra.mrb[0].mxu0 %v481
  %v584 = vpop.f32.mrb[0].mxu0
  %v585 = vadd.f32 0.0, %v584
  %v586 = vpop.f32.mrb[0].mxu0
  %587 = vdwg.mxu0
  %v588 = vadd.f32 %v304, %v550
  %v589 = vadd.f32 %v305, %v555
  %v590 = vadd.f32 %v306, %v560
  %v591 = vadd.f32 %v307, %v565
  %v592 = vadd.f32 %v308, %v570
  %v593 = vadd.f32 %v309, %v575
  %v594 = vadd.f32 %v310, %v580
  %v595 = vadd.f32 %v311, %v585
  %s596 = scalar_lea.vmem %s1, 128
  %v597 = vld [vmem:[%s596] sm:$0xff]
  %v598 = vld [vmem:[%s596 + $0x8] sm:$0xff]
  %v599 = vld [vmem:[%s596 + $0x10] sm:$0xff]
  %v600 = vld [vmem:[%s596 + $0x18] sm:$0xff]
  %v601 = vld [vmem:[%s596 + $0x20] sm:$0xff]
  %v602 = vld [vmem:[%s596 + $0x28] sm:$0xff]
  %v603 = vld [vmem:[%s596 + $0x30] sm:$0xff]
  %v604 = vld [vmem:[%s596 + $0x38] sm:$0xff]
  %v606 = vsel %vm36, %v597, 0
  %v609 = vsel %vm36, %v598, 0
  %v612 = vsel %vm36, %v599, 0
  %v615 = vsel %vm36, %v600, 0
  %v618 = vsel %vm36, %v601, 0
  %v621 = vsel %vm36, %v602, 0
  %v624 = vsel %vm36, %v603, 0
  %v627 = vsel %vm36, %v604, 0
  %629 = vmatprep.subr.mxu0 0.0
  %630 = vmatpush1.msra.mxu0 %v32
  %631 = vmatprep.subr.mxu0 0.0
  %632 = vmatpush1.msra.mxu0 %v33
  %633 = vmatprep.subr.mxu0 0.0
  %634 = vmatpush1.msra.mxu0 %v34
  %635 = vmatprep.subr.mxu0 0.0
  %636 = vmatpush1.msra.mxu0 %v35
  %637 = vmatprep.subr.mxu0 0.0
  %638 = vmatpush1.msra.mxu0 0.0
  %639 = vmatprep.subr.mxu0 0.0
  %640 = vmatpush1.msra.mxu0 0.0
  %641 = vmatprep.subr.mxu0 0.0
  %642 = vmatpush1.msra.mxu0 0.0
  %643 = vmatprep.subr.mxu0 0.0
  %644 = vmatpush1.msra.mxu0 0.0
  %645 = vmatprep.subr.mxu0 0.0
  %646 = vmatpush1.msra.mxu0 0.0
  %647 = vmatprep.subr.mxu0 0.0
  %648 = vmatpush1.msra.mxu0 0.0
  %649 = vmatprep.subr.mxu0 0.0
  %650 = vmatpush1.msra.mxu0 0.0
  %651 = vmatprep.subr.mxu0 0.0
  %652 = vmatpush1.msra.mxu0 0.0
  %653 = vmatprep.subr.mxu0 0.0
  %654 = vmatpush1.msra.mxu0 0.0
  %655 = vmatprep.subr.mxu0 0.0
  %656 = vmatpush1.msra.mxu0 0.0
  %657 = vmatprep.subr.mxu0 0.0
  %658 = vmatpush1.msra.mxu0 0.0
  %659 = vmatprep.subr.mxu0 0.0
  %660 = vmatpush1.msra.mxu0 0.0
  %661 = vmatprep.subr.mxu0 0.0
  %662 = vmatpush1.msra.mxu0 0.0
  %663 = vmatprep.subr.mxu0 0.0
  %664 = vmatpush1.msra.mxu0 0.0
  %665 = vmatprep.subr.mxu0 0.0
  %666 = vmatpush1.msra.mxu0 0.0
  %667 = vmatprep.subr.mxu0 0.0
  %668 = vmatpush1.msra.mxu0 0.0
  %669 = vmatprep.subr.mxu0 0.0
  %670 = vmatpush1.msra.mxu0 0.0
  %671 = vmatprep.subr.mxu0 0.0
  %672 = vmatpush1.msra.mxu0 0.0
  %673 = vmatprep.subr.mxu0 0.0
  %674 = vmatpush1.msra.mxu0 0.0
  %675 = vmatprep.subr.mxu0 0.0
  %676 = vmatpush1.msra.mxu0 0.0
  %677 = vmatprep.subr.mxu0 0.0
  %678 = vmatpush1.msra.mxu0 0.0
  %679 = vmatprep.subr.mxu0 0.0
  %680 = vmatpush1.msra.mxu0 0.0
  %681 = vmatprep.subr.mxu0 0.0
  %682 = vmatpush1.msra.mxu0 0.0
  %683 = vmatprep.subr.mxu0 0.0
  %684 = vmatpush1.msra.mxu0 0.0
  %685 = vmatprep.subr.mxu0 0.0
  %686 = vmatpush1.msra.mxu0 0.0
  %687 = vmatprep.subr.mxu0 0.0
  %688 = vmatpush1.msra.mxu0 0.0
  %689 = vmatprep.subr.mxu0 0.0
  %690 = vmatpush1.msra.mxu0 0.0
  %691 = vmatprep.subr.mxu0 0.0
  %692 = vmatpush1.msra.mxu0 0.0
  %693 = vmatprep.mubr.f32.mxu0 0.0
  %694 = vmatmul.mubr.f32.gmra.mrb[0].mxu0 %v606
  %v695 = vpop.f32.mrb[0].mxu0
  %v696 = vadd.f32 0.0, %v695
  %v697 = vpop.f32.mrb[0].mxu0
  %698 = vmatprep.mubr.f32.mxu0 0.0
  %699 = vmatmul.mubr.f32.gmra.mrb[0].mxu0 %v609
  %v700 = vpop.f32.mrb[0].mxu0
  %v701 = vadd.f32 0.0, %v700
  %v702 = vpop.f32.mrb[0].mxu0
  %703 = vmatprep.mubr.f32.mxu0 0.0
  %704 = vmatmul.mubr.f32.gmra.mrb[0].mxu0 %v612
  %v705 = vpop.f32.mrb[0].mxu0
  %v706 = vadd.f32 0.0, %v705
  %v707 = vpop.f32.mrb[0].mxu0
  %708 = vmatprep.mubr.f32.mxu0 0.0
  %709 = vmatmul.mubr.f32.gmra.mrb[0].mxu0 %v615
  %v710 = vpop.f32.mrb[0].mxu0
  %v711 = vadd.f32 0.0, %v710
  %v712 = vpop.f32.mrb[0].mxu0
  %713 = vmatprep.mubr.f32.mxu0 0.0
  %714 = vmatmul.mubr.f32.gmra.mrb[0].mxu0 %v618
  %v715 = vpop.f32.mrb[0].mxu0
  %v716 = vadd.f32 0.0, %v715
  %v717 = vpop.f32.mrb[0].mxu0
  %718 = vmatprep.mubr.f32.mxu0 0.0
  %719 = vmatmul.mubr.f32.gmra.mrb[0].mxu0 %v621
  %v720 = vpop.f32.mrb[0].mxu0
  %v721 = vadd.f32 0.0, %v720
  %v722 = vpop.f32.mrb[0].mxu0
  %723 = vmatprep.mubr.f32.mxu0 0.0
  %724 = vmatmul.mubr.f32.gmra.mrb[0].mxu0 %v624
  %v725 = vpop.f32.mrb[0].mxu0
  %v726 = vadd.f32 0.0, %v725
  %v727 = vpop.f32.mrb[0].mxu0
  %728 = vmatprep.mubr.f32.mxu0 0.0
  %729 = vmatmul.mubr.f32.gmra.mrb[0].mxu0 %v627
  %v730 = vpop.f32.mrb[0].mxu0
  %v731 = vadd.f32 0.0, %v730
  %v732 = vpop.f32.mrb[0].mxu0
  %733 = vdwg.mxu0
  %s734 = scalar_lea.vmem %s2, 128
  %v735 = vld [vmem:[%s734] sm:$0xff]
  %v736 = vld [vmem:[%s734 + $0x8] sm:$0xff]
  %v737 = vld [vmem:[%s734 + $0x10] sm:$0xff]
  %v738 = vld [vmem:[%s734 + $0x18] sm:$0xff]
  %v739 = vld [vmem:[%s734 + $0x20] sm:$0xff]
  %v740 = vld [vmem:[%s734 + $0x28] sm:$0xff]
  %v741 = vld [vmem:[%s734 + $0x30] sm:$0xff]
  %v742 = vld [vmem:[%s734 + $0x38] sm:$0xff]
  %v744 = vsel %vm174, %v696, 0
  %v747 = vsel %vm174, %v701, 0
  %v750 = vsel %vm174, %v706, 0
  %v753 = vsel %vm174, %v711, 0
  %v756 = vsel %vm174, %v716, 0
  %v759 = vsel %vm174, %v721, 0
  %v762 = vsel %vm174, %v726, 0
  %v765 = vsel %vm174, %v731, 0
  %767 = vmatprep.subr.mxu0 0.0
  %768 = vmatpush1.msra.mxu0 %v735
  %769 = vmatprep.subr.mxu0 0.0
  %770 = vmatpush1.msra.mxu0 %v736
  %771 = vmatprep.subr.mxu0 0.0
  %772 = vmatpush1.msra.mxu0 %v737
  %773 = vmatprep.subr.mxu0 0.0
  %774 = vmatpush1.msra.mxu0 %v738
  %775 = vmatprep.subr.mxu0 0.0
  %776 = vmatpush1.msra.mxu0 %v739
  %777 = vmatprep.subr.mxu0 0.0
  %778 = vmatpush1.msra.mxu0 %v740
  %779 = vmatprep.subr.mxu0 0.0
  %780 = vmatpush1.msra.mxu0 %v741
  %781 = vmatprep.subr.mxu0 0.0
  %782 = vmatpush1.msra.mxu0 %v742
  %783 = vmatprep.subr.mxu0 0.0
  %784 = vmatpush1.msra.mxu0 0.0
  %785 = vmatprep.subr.mxu0 0.0
  %786 = vmatpush1.msra.mxu0 0.0
  %787 = vmatprep.subr.mxu0 0.0
  %788 = vmatpush1.msra.mxu0 0.0
  %789 = vmatprep.subr.mxu0 0.0
  %790 = vmatpush1.msra.mxu0 0.0
  %791 = vmatprep.subr.mxu0 0.0
  %792 = vmatpush1.msra.mxu0 0.0
  %793 = vmatprep.subr.mxu0 0.0
  %794 = vmatpush1.msra.mxu0 0.0
  %795 = vmatprep.subr.mxu0 0.0
  %796 = vmatpush1.msra.mxu0 0.0
  %797 = vmatprep.subr.mxu0 0.0
  %798 = vmatpush1.msra.mxu0 0.0
  %799 = vmatprep.subr.mxu0 0.0
  %800 = vmatpush1.msra.mxu0 0.0
  %801 = vmatprep.subr.mxu0 0.0
  %802 = vmatpush1.msra.mxu0 0.0
  %803 = vmatprep.subr.mxu0 0.0
  %804 = vmatpush1.msra.mxu0 0.0
  %805 = vmatprep.subr.mxu0 0.0
  %806 = vmatpush1.msra.mxu0 0.0
  %807 = vmatprep.subr.mxu0 0.0
  %808 = vmatpush1.msra.mxu0 0.0
  %809 = vmatprep.subr.mxu0 0.0
  %810 = vmatpush1.msra.mxu0 0.0
  %811 = vmatprep.subr.mxu0 0.0
  %812 = vmatpush1.msra.mxu0 0.0
  %813 = vmatprep.subr.mxu0 0.0
  %814 = vmatpush1.msra.mxu0 0.0
  %815 = vmatprep.subr.mxu0 0.0
  %816 = vmatpush1.msra.mxu0 0.0
  %817 = vmatprep.subr.mxu0 0.0
  %818 = vmatpush1.msra.mxu0 0.0
  %819 = vmatprep.subr.mxu0 0.0
  %820 = vmatpush1.msra.mxu0 0.0
  %821 = vmatprep.subr.mxu0 0.0
  %822 = vmatpush1.msra.mxu0 0.0
  %823 = vmatprep.subr.mxu0 0.0
  %824 = vmatpush1.msra.mxu0 0.0
  %825 = vmatprep.subr.mxu0 0.0
  %826 = vmatpush1.msra.mxu0 0.0
  %827 = vmatprep.subr.mxu0 0.0
  %828 = vmatpush1.msra.mxu0 0.0
  %829 = vmatprep.subr.mxu0 0.0
  %830 = vmatpush1.msra.mxu0 0.0
  %831 = vmatprep.mubr.f32.mxu0 0.0
  %832 = vmatmul.mubr.f32.gmra.mrb[0].mxu0 %v744
  %v833 = vpop.f32.mrb[0].mxu0
  %v834 = vadd.f32 0.0, %v833
  %v835 = vpop.f32.mrb[0].mxu0
  %836 = vmatprep.mubr.f32.mxu0 0.0
  %837 = vmatmul.mubr.f32.gmra.mrb[0].mxu0 %v747
  %v838 = vpop.f32.mrb[0].mxu0
  %v839 = vadd.f32 0.0, %v838
  %v840 = vpop.f32.mrb[0].mxu0
  %841 = vmatprep.mubr.f32.mxu0 0.0
  %842 = vmatmul.mubr.f32.gmra.mrb[0].mxu0 %v750
  %v843 = vpop.f32.mrb[0].mxu0
  %v844 = vadd.f32 0.0, %v843
  %v845 = vpop.f32.mrb[0].mxu0
  %846 = vmatprep.mubr.f32.mxu0 0.0
  %847 = vmatmul.mubr.f32.gmra.mrb[0].mxu0 %v753
  %v848 = vpop.f32.mrb[0].mxu0
  %v849 = vadd.f32 0.0, %v848
  %v850 = vpop.f32.mrb[0].mxu0
  %851 = vmatprep.mubr.f32.mxu0 0.0
  %852 = vmatmul.mubr.f32.gmra.mrb[0].mxu0 %v756
  %v853 = vpop.f32.mrb[0].mxu0
  %v854 = vadd.f32 0.0, %v853
  %v855 = vpop.f32.mrb[0].mxu0
  %856 = vmatprep.mubr.f32.mxu0 0.0
  %857 = vmatmul.mubr.f32.gmra.mrb[0].mxu0 %v759
  %v858 = vpop.f32.mrb[0].mxu0
  %v859 = vadd.f32 0.0, %v858
  %v860 = vpop.f32.mrb[0].mxu0
  %861 = vmatprep.mubr.f32.mxu0 0.0
  %862 = vmatmul.mubr.f32.gmra.mrb[0].mxu0 %v762
  %v863 = vpop.f32.mrb[0].mxu0
  %v864 = vadd.f32 0.0, %v863
  %v865 = vpop.f32.mrb[0].mxu0
  %866 = vmatprep.mubr.f32.mxu0 0.0
  %867 = vmatmul.mubr.f32.gmra.mrb[0].mxu0 %v765
  %v868 = vpop.f32.mrb[0].mxu0
  %v869 = vadd.f32 0.0, %v868
  %v870 = vpop.f32.mrb[0].mxu0
  %871 = vdwg.mxu0
  %v872 = vadd.f32 %v588, %v834
  %v873 = vadd.f32 %v589, %v839
  %v874 = vadd.f32 %v590, %v844
  %v875 = vadd.f32 %v591, %v849
  %v876 = vadd.f32 %v592, %v854
  %v877 = vadd.f32 %v593, %v859
  %v878 = vadd.f32 %v594, %v864
  %v879 = vadd.f32 %v595, %v869
  %880 = vst [vmem:[%s4] sm:$0xff] %v872
  %881 = vst [vmem:[%s4 + $0x8] sm:$0xff] %v873
  %882 = vst [vmem:[%s4 + $0x10] sm:$0xff] %v874
  %883 = vst [vmem:[%s4 + $0x18] sm:$0xff] %v875
  %884 = vst [vmem:[%s4 + $0x20] sm:$0xff] %v876
  %885 = vst [vmem:[%s4 + $0x28] sm:$0xff] %v877
  %886 = vst [vmem:[%s4 + $0x30] sm:$0xff] %v878
  %887 = vst [vmem:[%s4 + $0x38] sm:$0xff] %v879
  // Predicated region
  $region18: #{upsample_conv_layer.1} parent=0 // pred_check
    _
  $region19: #{upsample_conv_layer.1} parent=0 // pred_check_branch
    %889 = sbr.rel (0) target = $region21
  $region20: #{upsample_conv_layer.1} parent=0 // pred_region
    _
  $region21: #{upsample_conv_layer.1} parent=0 // pred_fallthru
    _
  // Predicated region
  $region22: #{upsample_conv_layer.1} parent=0 // pred_check
    _
  $region23: #{upsample_conv_layer.1} parent=0 // pred_check_branch
    %891 = sbr.rel (0) target = $region25
  $region24: #{upsample_conv_layer.1} parent=0 // pred_region
    _
  $region25: #{upsample_conv_layer.1} parent=0 // pred_fallthru
    _

</llo_original>
